<compile_context>
chip_gen: v7x
topology: tpu7x:2x2x1
jax: 0.10.0
libtpu: 0.0.40
codegen_flags: <defaults>
</compile_context>

<pallas_src>
import functools

import jax
import jax.numpy as jnp
from jax import lax
from jax.experimental import pallas as pl
from jax.experimental.pallas import tpu as pltpu


def _siamese_lstm_kernel(num_layers, S, B, H, V, *refs):
    """Fused multi-layer LSTM over the siamese-fused batch (B = 2 * batch).

    Ref layout (statics bound via functools.partial):
      ids_ref  : (S*B, 1) int32   time-major flattened token ids
      mask_ref : (S*B, 1) f32     time-major flattened attention mask
      layer 0  : t0   (V, 4H) bf16  = embedding @ W_ih0^T (gate-permuted)
                 whh0 (H, 4H) bf16,  b0 (1, 4H) f32 (= b_ih + b_hh)
      layer l>0: wih_l (H, 4H) bf16, whh_l (H, 4H) bf16, b_l (1, 4H) f32
      hfin_ref : (num_layers*B, H) f32  final hidden state of every layer

    Gate columns are pre-permuted from PyTorch (i,f,g,o) to (i,f,o,g) so one
    sigmoid covers lanes [:3H] and one tanh covers [3H:].  h/c never touch
    VMEM scratch — they are SSA values carried through the unrolled loop.
    """
    it = iter(refs)
    ids_ref = next(it)
    mask_ref = next(it)
    t0_ref = next(it)
    whh0_ref = next(it)
    b0_ref = next(it)
    upper = [(next(it), next(it), next(it)) for _ in range(num_layers - 1)]
    hfin_ref = next(it)

    # ---- layer-0 input projection: one-hot(ids) @ (emb @ W_ih^T), then mask+bias.
    # One (S*B, V) x (V, 4H) MXU op replaces the embedding gather AND the
    # x @ W_ih matmul; the per-(t,b) scalar mask rides the f32 bias-add pass.
    onehot = (ids_ref[...] ==
              lax.broadcasted_iota(jnp.int32, (S * B, V), 1)).astype(jnp.bfloat16)
    gx = jnp.dot(onehot, t0_ref[...], preferred_element_type=jnp.float32)
    gx = gx * mask_ref[...] + b0_ref[...]                       # (S*B, 4H) f32

    def run_layer(gx, w_hh, collect_seq):
        """S-step recurrence; h/c register-resident, static per-step slices."""
        h = jnp.zeros((B, H), jnp.float32)
        c = jnp.zeros((B, H), jnp.float32)
        hs = []
        for t in range(S):                                      # fully unrolled
            gates = (jnp.dot(h.astype(w_hh.dtype), w_hh,
                             preferred_element_type=jnp.float32)
                     + gx[t * B:(t + 1) * B, :])                # (B, 4H)
            sig = jax.nn.sigmoid(gates[:, 0:3 * H])             # i | f | o, one EUP pass
            i_g = sig[:, 0 * H:1 * H]
            f_g = sig[:, 1 * H:2 * H]
            o_g = sig[:, 2 * H:3 * H]
            g_g = jnp.tanh(gates[:, 3 * H:4 * H])               # g, one EUP pass
            c = f_g * c + i_g * g_g
            h = o_g * jnp.tanh(c)
            if collect_seq:
                hs.append(h)
        return h, hs

    h_finals = []
    h_fin, hs = run_layer(gx, whh0_ref[...], collect_seq=(num_layers > 1))
    h_finals.append(h_fin)

    for l in range(1, num_layers):
        wih_ref, whh_ref, b_ref = upper[l - 1]
        # Inter-layer activation stays in registers; no HBM/VMEM round-trip.
        x_l = jnp.concatenate(hs, axis=0).astype(jnp.bfloat16)  # (S*B, H)
        gx_l = (jnp.dot(x_l, wih_ref[...], preferred_element_type=jnp.float32)
                + b_ref[...])
        h_fin, hs = run_layer(gx_l, whh_ref[...],
                              collect_seq=(l < num_layers - 1))
        h_finals.append(h_fin)

    hfin_ref[...] = jnp.concatenate(h_finals, axis=0)           # (L*B, H) f32


def _gate_perm(h):
    # PyTorch gate block order (i, f, g, o) -> kernel order (i, f, o, g).
    return jnp.concatenate([jnp.arange(0, h), jnp.arange(h, 2 * h),
                            jnp.arange(3 * h, 4 * h), jnp.arange(2 * h, 3 * h)])


def _prep_layer(w_ih, w_hh, b_ih, b_hh):
    """PyTorch-layout LSTM layer params -> kernel layout (transposed, permuted)."""
    H = w_hh.shape[1]
    perm = _gate_perm(H)
    w_ih_t = jnp.transpose(w_ih[perm])            # (H_in, 4H)
    w_hh_t = jnp.transpose(w_hh[perm])            # (H, 4H)
    bias = (b_ih + b_hh)[perm][None, :]           # (1, 4H), f32
    return w_ih_t, w_hh_t, bias


def init_params(key, input_size, hidden_size, num_layers):
    """Parameters in PyTorch layout: w_ih/w_hh are (4H, H), biases (4H,)."""
    ks = jax.random.split(key, 1 + 4 * num_layers + 4)
    k = 1.0 / jnp.sqrt(jnp.float32(hidden_size))
    params = {"embedding": jax.random.normal(
        ks[0], (input_size, hidden_size), jnp.float32)}
    lstm = []
    for l in range(num_layers):
        base = 1 + 4 * l
        w_ih = jax.random.uniform(ks[base + 0], (4 * hidden_size, hidden_size),
                                  jnp.float32, -k, k)
        w_hh = jax.random.uniform(ks[base + 1], (4 * hidden_size, hidden_size),
                                  jnp.float32, -k, k)
        b_ih = jax.random.uniform(ks[base + 2], (4 * hidden_size,),
                                  jnp.float32, -k, k)
        b_hh = jax.random.uniform(ks[base + 3], (4 * hidden_size,),
                                  jnp.float32, -k, k)
        lstm.append((w_ih, w_hh, b_ih, b_hh))
    params["lstm"] = lstm
    # TODO(synk): fc1/fc2 are defined in the PyTorch module but never used in
    # forward(); initialized for parity only, not applied.
    params["fc1_w"] = jax.random.uniform(ks[-4], (hidden_size, hidden_size),
                                         jnp.float32, -k, k)
    params["fc1_b"] = jnp.zeros((hidden_size,), jnp.float32)
    params["fc2_w"] = jax.random.uniform(ks[-2], (1, hidden_size),
                                         jnp.float32, -k, k)
    params["fc2_b"] = jnp.zeros((1,), jnp.float32)
    return params


@jax.jit
def siamese_forward(params, input_ids, attention_mask):
    """input_ids: (B, 2, S) int32, attention_mask: (B, 2, S) float.

    Returns (output_A, output_B), each (B, H) when num_layers == 1
    (matching PyTorch h.squeeze(0)), else (num_layers, B, H)."""
    emb = params["embedding"]                     # (V, H) f32
    Bb, _, S = input_ids.shape
    V, H = emb.shape
    B2 = 2 * Bb
    layers = params["lstm"]
    L = len(layers)

    # Glue (tiny): fuse the two siamese branches into batch, go time-major,
    # flatten to (S*B2, 1).  Rows 0..B-1 are branch A, B..2B-1 are branch B.
    ids = jnp.transpose(input_ids, (1, 0, 2)).reshape(B2, S)          # (2B, S)
    ids_t = jnp.transpose(ids, (1, 0)).reshape(S * B2, 1)             # (S*2B, 1)
    msk = jnp.transpose(attention_mask, (1, 0, 2)).reshape(B2, S)
    msk_t = jnp.transpose(msk, (1, 0)).reshape(S * B2, 1).astype(jnp.float32)

    kernel_inputs = [ids_t, msk_t]
    for l, (w_ih, w_hh, b_ih, b_hh) in enumerate(layers):
        w_ih_t, w_hh_t, bias = _prep_layer(w_ih, w_hh, b_ih, b_hh)
        if l == 0:
            # Fold the embedding table into the layer-0 input projection.
            t0 = jnp.dot(emb, w_ih_t).astype(jnp.bfloat16)            # (V, 4H)
            kernel_inputs += [t0, w_hh_t.astype(jnp.bfloat16), bias]
        else:
            kernel_inputs += [w_ih_t.astype(jnp.bfloat16),
                              w_hh_t.astype(jnp.bfloat16), bias]

    kernel = functools.partial(_siamese_lstm_kernel, L, S, B2, H, V)
    vmem_spec = pl.BlockSpec(memory_space=pltpu.MemorySpace.VMEM)
    out = pl.pallas_call(
        kernel,
        out_shape=jax.ShapeDtypeStruct((L * B2, H), jnp.float32),
        in_specs=[vmem_spec] * len(kernel_inputs),
        out_specs=vmem_spec,
    )(*kernel_inputs)

    h = out.reshape(L, B2, H)
    h_A, h_B = h[:, :Bb], h[:, Bb:]               # un-fuse siamese branches
    if L == 1:                                    # PyTorch h.squeeze(0)
        h_A, h_B = h_A[0], h_B[0]
    return h_A, h_B


if __name__ == "__main__":
    input_size, hidden_size, num_layers = 16, 32, 1
    batch, seq = 4, 8

    key = jax.random.PRNGKey(0)
    kp, kid, klen = jax.random.split(key, 3)
    params = init_params(kp, input_size, hidden_size, num_layers)

    input_ids = jax.random.randint(kid, (batch, 2, seq), 0, input_size,
                                   dtype=jnp.int32)
    lengths = jax.random.randint(klen, (batch, 2, 1), 1, seq + 1)
    attention_mask = (jnp.arange(seq)[None, None, :] < lengths).astype(jnp.float32)

    out_A, out_B = siamese_forward(params, input_ids, attention_mask)
    jax.block_until_ready((out_A, out_B))
    assert out_A.shape == (batch, hidden_size)
    assert out_B.shape == (batch, hidden_size)
    print("KERNEL_OK")
</pallas_src>

<mosaic_0001>
module attributes {stable_mosaic.version = 11 : i64} {
  func.func @_siamese_lstm_kernel(%arg0: memref<64x1xi32, #tpu.memory_space<vmem>>, %arg1: memref<64x1xf32, #tpu.memory_space<vmem>>, %arg2: memref<16x128xbf16, #tpu.memory_space<vmem>>, %arg3: memref<32x128xbf16, #tpu.memory_space<vmem>>, %arg4: memref<1x128xf32, #tpu.memory_space<vmem>>, %arg5: memref<8x32xf32, #tpu.memory_space<vmem>>) attributes {dimension_semantics = [], scalar_prefetch = 0 : i64, scratch_operands = 0 : i64, tpu.core_type = #tpu.core_type<tc>} {
    %c0 = arith.constant 0 : index
    %c0_0 = arith.constant 0 : index
    %0 = vector.load %arg0[%c0, %c0_0] : memref<64x1xi32, #tpu.memory_space<vmem>>, vector<64x1xi32>
    %1 = tpu.iota {dimensions = array<i32: 1>} : vector<64x16xi32>
    %2 = vector.broadcast %0 : vector<64x1xi32> to vector<64x16xi32>
    %3 = arith.cmpi eq, %2, %1 : vector<64x16xi32>
    %4 = arith.extui %3 : vector<64x16xi1> to vector<64x16xi32>
    %5 = arith.sitofp %4 : vector<64x16xi32> to vector<64x16xf32>
    %6 = arith.truncf %5 : vector<64x16xf32> to vector<64x16xbf16>
    %c0_1 = arith.constant 0 : index
    %c0_2 = arith.constant 0 : index
    %7 = vector.load %arg2[%c0_1, %c0_2] : memref<16x128xbf16, #tpu.memory_space<vmem>>, vector<16x128xbf16>
    %cst = arith.constant dense<0.000000e+00> : vector<64x128xf32>
    %8 = tpu.matmul %6, %7, %cst {dimension_numbers = #tpu.dot_dimension_numbers<[1], [0], [0], [1], [0, 0, 1, 1], [], []>} : vector<64x16xbf16>, vector<16x128xbf16>, vector<64x128xf32> -> vector<64x128xf32>
    %c0_3 = arith.constant 0 : index
    %c0_4 = arith.constant 0 : index
    %9 = vector.load %arg1[%c0_3, %c0_4] : memref<64x1xf32, #tpu.memory_space<vmem>>, vector<64x1xf32>
    %10 = vector.broadcast %9 : vector<64x1xf32> to vector<64x128xf32>
    %11 = arith.mulf %8, %10 : vector<64x128xf32>
    %c0_5 = arith.constant 0 : index
    %c0_6 = arith.constant 0 : index
    %12 = vector.load %arg4[%c0_5, %c0_6] : memref<1x128xf32, #tpu.memory_space<vmem>>, vector<1x128xf32>
    %13 = vector.broadcast %12 : vector<1x128xf32> to vector<64x128xf32>
    %14 = arith.addf %11, %13 : vector<64x128xf32>
    %c0_7 = arith.constant 0 : index
    %c0_8 = arith.constant 0 : index
    %15 = vector.load %arg3[%c0_7, %c0_8] : memref<32x128xbf16, #tpu.memory_space<vmem>>, vector<32x128xbf16>
    %cst_9 = arith.constant 0.000000e+00 : f32
    %16 = vector.broadcast %cst_9 : f32 to vector<8x32xf32>
    %cst_10 = arith.constant 0.000000e+00 : f32
    %17 = vector.broadcast %cst_10 : f32 to vector<8x32xf32>
    %18 = arith.truncf %16 : vector<8x32xf32> to vector<8x32xbf16>
    %cst_11 = arith.constant dense<0.000000e+00> : vector<8x128xf32>
    %19 = tpu.matmul %18, %15, %cst_11 {dimension_numbers = #tpu.dot_dimension_numbers<[1], [0], [0], [1], [0, 0, 1, 1], [], []>} : vector<8x32xbf16>, vector<32x128xbf16>, vector<8x128xf32> -> vector<8x128xf32>
    %20 = vector.extract_strided_slice %14 {offsets = [0, 0], sizes = [8, 128], strides = [1, 1]} : vector<64x128xf32> to vector<8x128xf32>
    %21 = arith.addf %19, %20 : vector<8x128xf32>
    %22 = vector.extract_strided_slice %21 {offsets = [0, 0], sizes = [8, 96], strides = [1, 1]} : vector<8x128xf32> to vector<8x96xf32>
    %23 = arith.negf %22 : vector<8x96xf32>
    %24 = math.exp %23 : vector<8x96xf32>
    %cst_12 = arith.constant 1.000000e+00 : f32
    %25 = vector.broadcast %cst_12 : f32 to vector<8x96xf32>
    %26 = arith.addf %25, %24 : vector<8x96xf32>
    %27 = arith.divf %25, %26 : vector<8x96xf32>
    %28 = vector.extract_strided_slice %27 {offsets = [0, 0], sizes = [8, 32], strides = [1, 1]} : vector<8x96xf32> to vector<8x32xf32>
    %29 = vector.extract_strided_slice %27 {offsets = [0, 32], sizes = [8, 32], strides = [1, 1]} : vector<8x96xf32> to vector<8x32xf32>
    %30 = vector.extract_strided_slice %27 {offsets = [0, 64], sizes = [8, 32], strides = [1, 1]} : vector<8x96xf32> to vector<8x32xf32>
    %31 = vector.extract_strided_slice %21 {offsets = [0, 96], sizes = [8, 32], strides = [1, 1]} : vector<8x128xf32> to vector<8x32xf32>
    %32 = math.tanh %31 : vector<8x32xf32>
    %33 = arith.mulf %29, %17 : vector<8x32xf32>
    %34 = arith.mulf %28, %32 : vector<8x32xf32>
    %35 = arith.addf %33, %34 : vector<8x32xf32>
    %36 = math.tanh %35 : vector<8x32xf32>
    %37 = arith.mulf %30, %36 : vector<8x32xf32>
    %38 = arith.truncf %37 : vector<8x32xf32> to vector<8x32xbf16>
    %cst_13 = arith.constant dense<0.000000e+00> : vector<8x128xf32>
    %39 = tpu.matmul %38, %15, %cst_13 {dimension_numbers = #tpu.dot_dimension_numbers<[1], [0], [0], [1], [0, 0, 1, 1], [], []>} : vector<8x32xbf16>, vector<32x128xbf16>, vector<8x128xf32> -> vector<8x128xf32>
    %40 = vector.extract_strided_slice %14 {offsets = [8, 0], sizes = [8, 128], strides = [1, 1]} : vector<64x128xf32> to vector<8x128xf32>
    %41 = arith.addf %39, %40 : vector<8x128xf32>
    %42 = vector.extract_strided_slice %41 {offsets = [0, 0], sizes = [8, 96], strides = [1, 1]} : vector<8x128xf32> to vector<8x96xf32>
    %43 = arith.negf %42 : vector<8x96xf32>
    %44 = math.exp %43 : vector<8x96xf32>
    %cst_14 = arith.constant 1.000000e+00 : f32
    %45 = vector.broadcast %cst_14 : f32 to vector<8x96xf32>
    %46 = arith.addf %45, %44 : vector<8x96xf32>
    %47 = arith.divf %45, %46 : vector<8x96xf32>
    %48 = vector.extract_strided_slice %47 {offsets = [0, 0], sizes = [8, 32], strides = [1, 1]} : vector<8x96xf32> to vector<8x32xf32>
    %49 = vector.extract_strided_slice %47 {offsets = [0, 32], sizes = [8, 32], strides = [1, 1]} : vector<8x96xf32> to vector<8x32xf32>
    %50 = vector.extract_strided_slice %47 {offsets = [0, 64], sizes = [8, 32], strides = [1, 1]} : vector<8x96xf32> to vector<8x32xf32>
    %51 = vector.extract_strided_slice %41 {offsets = [0, 96], sizes = [8, 32], strides = [1, 1]} : vector<8x128xf32> to vector<8x32xf32>
    %52 = math.tanh %51 : vector<8x32xf32>
    %53 = arith.mulf %49, %35 : vector<8x32xf32>
    %54 = arith.mulf %48, %52 : vector<8x32xf32>
    %55 = arith.addf %53, %54 : vector<8x32xf32>
    %56 = math.tanh %55 : vector<8x32xf32>
    %57 = arith.mulf %50, %56 : vector<8x32xf32>
    %58 = arith.truncf %57 : vector<8x32xf32> to vector<8x32xbf16>
    %cst_15 = arith.constant dense<0.000000e+00> : vector<8x128xf32>
    %59 = tpu.matmul %58, %15, %cst_15 {dimension_numbers = #tpu.dot_dimension_numbers<[1], [0], [0], [1], [0, 0, 1, 1], [], []>} : vector<8x32xbf16>, vector<32x128xbf16>, vector<8x128xf32> -> vector<8x128xf32>
    %60 = vector.extract_strided_slice %14 {offsets = [16, 0], sizes = [8, 128], strides = [1, 1]} : vector<64x128xf32> to vector<8x128xf32>
    %61 = arith.addf %59, %60 : vector<8x128xf32>
    %62 = vector.extract_strided_slice %61 {offsets = [0, 0], sizes = [8, 96], strides = [1, 1]} : vector<8x128xf32> to vector<8x96xf32>
    %63 = arith.negf %62 : vector<8x96xf32>
    %64 = math.exp %63 : vector<8x96xf32>
    %cst_16 = arith.constant 1.000000e+00 : f32
    %65 = vector.broadcast %cst_16 : f32 to vector<8x96xf32>
    %66 = arith.addf %65, %64 : vector<8x96xf32>
    %67 = arith.divf %65, %66 : vector<8x96xf32>
    %68 = vector.extract_strided_slice %67 {offsets = [0, 0], sizes = [8, 32], strides = [1, 1]} : vector<8x96xf32> to vector<8x32xf32>
    %69 = vector.extract_strided_slice %67 {offsets = [0, 32], sizes = [8, 32], strides = [1, 1]} : vector<8x96xf32> to vector<8x32xf32>
    %70 = vector.extract_strided_slice %67 {offsets = [0, 64], sizes = [8, 32], strides = [1, 1]} : vector<8x96xf32> to vector<8x32xf32>
    %71 = vector.extract_strided_slice %61 {offsets = [0, 96], sizes = [8, 32], strides = [1, 1]} : vector<8x128xf32> to vector<8x32xf32>
    %72 = math.tanh %71 : vector<8x32xf32>
    %73 = arith.mulf %69, %55 : vector<8x32xf32>
    %74 = arith.mulf %68, %72 : vector<8x32xf32>
    %75 = arith.addf %73, %74 : vector<8x32xf32>
    %76 = math.tanh %75 : vector<8x32xf32>
    %77 = arith.mulf %70, %76 : vector<8x32xf32>
    %78 = arith.truncf %77 : vector<8x32xf32> to vector<8x32xbf16>
    %cst_17 = arith.constant dense<0.000000e+00> : vector<8x128xf32>
    %79 = tpu.matmul %78, %15, %cst_17 {dimension_numbers = #tpu.dot_dimension_numbers<[1], [0], [0], [1], [0, 0, 1, 1], [], []>} : vector<8x32xbf16>, vector<32x128xbf16>, vector<8x128xf32> -> vector<8x128xf32>
    %80 = vector.extract_strided_slice %14 {offsets = [24, 0], sizes = [8, 128], strides = [1, 1]} : vector<64x128xf32> to vector<8x128xf32>
    %81 = arith.addf %79, %80 : vector<8x128xf32>
    %82 = vector.extract_strided_slice %81 {offsets = [0, 0], sizes = [8, 96], strides = [1, 1]} : vector<8x128xf32> to vector<8x96xf32>
    %83 = arith.negf %82 : vector<8x96xf32>
    %84 = math.exp %83 : vector<8x96xf32>
    %cst_18 = arith.constant 1.000000e+00 : f32
    %85 = vector.broadcast %cst_18 : f32 to vector<8x96xf32>
    %86 = arith.addf %85, %84 : vector<8x96xf32>
    %87 = arith.divf %85, %86 : vector<8x96xf32>
    %88 = vector.extract_strided_slice %87 {offsets = [0, 0], sizes = [8, 32], strides = [1, 1]} : vector<8x96xf32> to vector<8x32xf32>
    %89 = vector.extract_strided_slice %87 {offsets = [0, 32], sizes = [8, 32], strides = [1, 1]} : vector<8x96xf32> to vector<8x32xf32>
    %90 = vector.extract_strided_slice %87 {offsets = [0, 64], sizes = [8, 32], strides = [1, 1]} : vector<8x96xf32> to vector<8x32xf32>
    %91 = vector.extract_strided_slice %81 {offsets = [0, 96], sizes = [8, 32], strides = [1, 1]} : vector<8x128xf32> to vector<8x32xf32>
    %92 = math.tanh %91 : vector<8x32xf32>
    %93 = arith.mulf %89, %75 : vector<8x32xf32>
    %94 = arith.mulf %88, %92 : vector<8x32xf32>
    %95 = arith.addf %93, %94 : vector<8x32xf32>
    %96 = math.tanh %95 : vector<8x32xf32>
    %97 = arith.mulf %90, %96 : vector<8x32xf32>
    %98 = arith.truncf %97 : vector<8x32xf32> to vector<8x32xbf16>
    %cst_19 = arith.constant dense<0.000000e+00> : vector<8x128xf32>
    %99 = tpu.matmul %98, %15, %cst_19 {dimension_numbers = #tpu.dot_dimension_numbers<[1], [0], [0], [1], [0, 0, 1, 1], [], []>} : vector<8x32xbf16>, vector<32x128xbf16>, vector<8x128xf32> -> vector<8x128xf32>
    %100 = vector.extract_strided_slice %14 {offsets = [32, 0], sizes = [8, 128], strides = [1, 1]} : vector<64x128xf32> to vector<8x128xf32>
    %101 = arith.addf %99, %100 : vector<8x128xf32>
    %102 = vector.extract_strided_slice %101 {offsets = [0, 0], sizes = [8, 96], strides = [1, 1]} : vector<8x128xf32> to vector<8x96xf32>
    %103 = arith.negf %102 : vector<8x96xf32>
    %104 = math.exp %103 : vector<8x96xf32>
    %cst_20 = arith.constant 1.000000e+00 : f32
    %105 = vector.broadcast %cst_20 : f32 to vector<8x96xf32>
    %106 = arith.addf %105, %104 : vector<8x96xf32>
    %107 = arith.divf %105, %106 : vector<8x96xf32>
    %108 = vector.extract_strided_slice %107 {offsets = [0, 0], sizes = [8, 32], strides = [1, 1]} : vector<8x96xf32> to vector<8x32xf32>
    %109 = vector.extract_strided_slice %107 {offsets = [0, 32], sizes = [8, 32], strides = [1, 1]} : vector<8x96xf32> to vector<8x32xf32>
    %110 = vector.extract_strided_slice %107 {offsets = [0, 64], sizes = [8, 32], strides = [1, 1]} : vector<8x96xf32> to vector<8x32xf32>
    %111 = vector.extract_strided_slice %101 {offsets = [0, 96], sizes = [8, 32], strides = [1, 1]} : vector<8x128xf32> to vector<8x32xf32>
    %112 = math.tanh %111 : vector<8x32xf32>
    %113 = arith.mulf %109, %95 : vector<8x32xf32>
    %114 = arith.mulf %108, %112 : vector<8x32xf32>
    %115 = arith.addf %113, %114 : vector<8x32xf32>
    %116 = math.tanh %115 : vector<8x32xf32>
    %117 = arith.mulf %110, %116 : vector<8x32xf32>
    %118 = arith.truncf %117 : vector<8x32xf32> to vector<8x32xbf16>
    %cst_21 = arith.constant dense<0.000000e+00> : vector<8x128xf32>
    %119 = tpu.matmul %118, %15, %cst_21 {dimension_numbers = #tpu.dot_dimension_numbers<[1], [0], [0], [1], [0, 0, 1, 1], [], []>} : vector<8x32xbf16>, vector<32x128xbf16>, vector<8x128xf32> -> vector<8x128xf32>
    %120 = vector.extract_strided_slice %14 {offsets = [40, 0], sizes = [8, 128], strides = [1, 1]} : vector<64x128xf32> to vector<8x128xf32>
    %121 = arith.addf %119, %120 : vector<8x128xf32>
    %122 = vector.extract_strided_slice %121 {offsets = [0, 0], sizes = [8, 96], strides = [1, 1]} : vector<8x128xf32> to vector<8x96xf32>
    %123 = arith.negf %122 : vector<8x96xf32>
    %124 = math.exp %123 : vector<8x96xf32>
    %cst_22 = arith.constant 1.000000e+00 : f32
    %125 = vector.broadcast %cst_22 : f32 to vector<8x96xf32>
    %126 = arith.addf %125, %124 : vector<8x96xf32>
    %127 = arith.divf %125, %126 : vector<8x96xf32>
    %128 = vector.extract_strided_slice %127 {offsets = [0, 0], sizes = [8, 32], strides = [1, 1]} : vector<8x96xf32> to vector<8x32xf32>
    %129 = vector.extract_strided_slice %127 {offsets = [0, 32], sizes = [8, 32], strides = [1, 1]} : vector<8x96xf32> to vector<8x32xf32>
    %130 = vector.extract_strided_slice %127 {offsets = [0, 64], sizes = [8, 32], strides = [1, 1]} : vector<8x96xf32> to vector<8x32xf32>
    %131 = vector.extract_strided_slice %121 {offsets = [0, 96], sizes = [8, 32], strides = [1, 1]} : vector<8x128xf32> to vector<8x32xf32>
    %132 = math.tanh %131 : vector<8x32xf32>
    %133 = arith.mulf %129, %115 : vector<8x32xf32>
    %134 = arith.mulf %128, %132 : vector<8x32xf32>
    %135 = arith.addf %133, %134 : vector<8x32xf32>
    %136 = math.tanh %135 : vector<8x32xf32>
    %137 = arith.mulf %130, %136 : vector<8x32xf32>
    %138 = arith.truncf %137 : vector<8x32xf32> to vector<8x32xbf16>
    %cst_23 = arith.constant dense<0.000000e+00> : vector<8x128xf32>
    %139 = tpu.matmul %138, %15, %cst_23 {dimension_numbers = #tpu.dot_dimension_numbers<[1], [0], [0], [1], [0, 0, 1, 1], [], []>} : vector<8x32xbf16>, vector<32x128xbf16>, vector<8x128xf32> -> vector<8x128xf32>
    %140 = vector.extract_strided_slice %14 {offsets = [48, 0], sizes = [8, 128], strides = [1, 1]} : vector<64x128xf32> to vector<8x128xf32>
    %141 = arith.addf %139, %140 : vector<8x128xf32>
    %142 = vector.extract_strided_slice %141 {offsets = [0, 0], sizes = [8, 96], strides = [1, 1]} : vector<8x128xf32> to vector<8x96xf32>
    %143 = arith.negf %142 : vector<8x96xf32>
    %144 = math.exp %143 : vector<8x96xf32>
    %cst_24 = arith.constant 1.000000e+00 : f32
    %145 = vector.broadcast %cst_24 : f32 to vector<8x96xf32>
    %146 = arith.addf %145, %144 : vector<8x96xf32>
    %147 = arith.divf %145, %146 : vector<8x96xf32>
    %148 = vector.extract_strided_slice %147 {offsets = [0, 0], sizes = [8, 32], strides = [1, 1]} : vector<8x96xf32> to vector<8x32xf32>
    %149 = vector.extract_strided_slice %147 {offsets = [0, 32], sizes = [8, 32], strides = [1, 1]} : vector<8x96xf32> to vector<8x32xf32>
    %150 = vector.extract_strided_slice %147 {offsets = [0, 64], sizes = [8, 32], strides = [1, 1]} : vector<8x96xf32> to vector<8x32xf32>
    %151 = vector.extract_strided_slice %141 {offsets = [0, 96], sizes = [8, 32], strides = [1, 1]} : vector<8x128xf32> to vector<8x32xf32>
    %152 = math.tanh %151 : vector<8x32xf32>
    %153 = arith.mulf %149, %135 : vector<8x32xf32>
    %154 = arith.mulf %148, %152 : vector<8x32xf32>
    %155 = arith.addf %153, %154 : vector<8x32xf32>
    %156 = math.tanh %155 : vector<8x32xf32>
    %157 = arith.mulf %150, %156 : vector<8x32xf32>
    %158 = arith.truncf %157 : vector<8x32xf32> to vector<8x32xbf16>
    %cst_25 = arith.constant dense<0.000000e+00> : vector<8x128xf32>
    %159 = tpu.matmul %158, %15, %cst_25 {dimension_numbers = #tpu.dot_dimension_numbers<[1], [0], [0], [1], [0, 0, 1, 1], [], []>} : vector<8x32xbf16>, vector<32x128xbf16>, vector<8x128xf32> -> vector<8x128xf32>
    %160 = vector.extract_strided_slice %14 {offsets = [56, 0], sizes = [8, 128], strides = [1, 1]} : vector<64x128xf32> to vector<8x128xf32>
    %161 = arith.addf %159, %160 : vector<8x128xf32>
    %162 = vector.extract_strided_slice %161 {offsets = [0, 0], sizes = [8, 96], strides = [1, 1]} : vector<8x128xf32> to vector<8x96xf32>
    %163 = arith.negf %162 : vector<8x96xf32>
    %164 = math.exp %163 : vector<8x96xf32>
    %cst_26 = arith.constant 1.000000e+00 : f32
    %165 = vector.broadcast %cst_26 : f32 to vector<8x96xf32>
    %166 = arith.addf %165, %164 : vector<8x96xf32>
    %167 = arith.divf %165, %166 : vector<8x96xf32>
    %168 = vector.extract_strided_slice %167 {offsets = [0, 0], sizes = [8, 32], strides = [1, 1]} : vector<8x96xf32> to vector<8x32xf32>
    %169 = vector.extract_strided_slice %167 {offsets = [0, 32], sizes = [8, 32], strides = [1, 1]} : vector<8x96xf32> to vector<8x32xf32>
    %170 = vector.extract_strided_slice %167 {offsets = [0, 64], sizes = [8, 32], strides = [1, 1]} : vector<8x96xf32> to vector<8x32xf32>
    %171 = vector.extract_strided_slice %161 {offsets = [0, 96], sizes = [8, 32], strides = [1, 1]} : vector<8x128xf32> to vector<8x32xf32>
    %172 = math.tanh %171 : vector<8x32xf32>
    %173 = arith.mulf %169, %155 : vector<8x32xf32>
    %174 = arith.mulf %168, %172 : vector<8x32xf32>
    %175 = arith.addf %173, %174 : vector<8x32xf32>
    %176 = math.tanh %175 : vector<8x32xf32>
    %177 = arith.mulf %170, %176 : vector<8x32xf32>
    %c0_27 = arith.constant 0 : index
    %c0_28 = arith.constant 0 : index
    %178 = vector.load %arg5[%c0_27, %c0_28] : memref<8x32xf32, #tpu.memory_space<vmem>>, vector<8x32xf32>
    tpu.vector_store %arg5[%c0_27, %c0_28], %177 {strides = array<i32>} : memref<8x32xf32, #tpu.memory_space<vmem>>, vector<8x32xf32>,
    return
  }
}

</mosaic_0001>

<llo_original>
// kernel: siamese_forward.1
$region0: #{siamese_forward.1}
  #allocation0 [shape = 'u32[]', space=smem, size = 0x4, offset = 0x4, fixed_abs, tag = 'smem constant byte address 0x4 - core index']
  #allocation1 [shape = 'u32[144,128]{1,0:T(1,128)}', space=vmem, size = 0x12000, scoped, tag = 'internal scratch']
  %s0 = inlined_call_operand.vmem [shape: s32[64,1], index: 0, kind: input, shape index: {}]
  %s1 = inlined_call_operand.vmem [shape: f32[64,1], index: 1, kind: input, shape index: {}]
  %s2 = inlined_call_operand.vmem [shape: bf16[16,128], index: 2, kind: input, shape index: {}]
  %s3 = inlined_call_operand.vmem [shape: bf16[32,128], index: 3, kind: input, shape index: {}]
  %s4 = inlined_call_operand.vmem [shape: f32[1,128], index: 4, kind: input, shape index: {}]
  %s5 = inlined_call_operand.vmem [shape: f32[8,32], index: 5, kind: output, shape index: {}]
  %s6 = sld [smem:[#allocation0]]
  $region30: #{siamese_forward.1} parent=0
    _
  %s8 = ssub.s32 1, %s6
  %s9 = scalar_select 0, %s8, %s6
  // Predicated region
  $region2: #{siamese_forward.1} parent=0 // pred_check
    _
  $region3: #{siamese_forward.1} parent=0 // pred_check_branch
    %11 = sbr.rel (0) target = $region5
  $region4: #{siamese_forward.1} parent=0 // pred_region
    _
  $region5: #{siamese_forward.1} parent=0 // pred_fallthru
    _
  // Predicated region
  $region6: #{siamese_forward.1} parent=0 // pred_check
    _
  $region7: #{siamese_forward.1} parent=0 // pred_check_branch
    %13 = sbr.rel (0) target = $region9
  $region8: #{siamese_forward.1} parent=0 // pred_region
    _
  $region9: #{siamese_forward.1} parent=0 // pred_fallthru
    _
  // Predicated region
  $region10: #{siamese_forward.1} parent=0 // pred_check
    _
  $region11: #{siamese_forward.1} parent=0 // pred_check_branch
    %15 = sbr.rel (0) target = $region13
  $region12: #{siamese_forward.1} parent=0 // pred_region
    _
  $region13: #{siamese_forward.1} parent=0 // pred_fallthru
    _
  // Predicated region
  $region14: #{siamese_forward.1} parent=0 // pred_check
    _
  $region15: #{siamese_forward.1} parent=0 // pred_check_branch
    %17 = sbr.rel (0) target = $region17
  $region16: #{siamese_forward.1} parent=0 // pred_region
    _
  $region17: #{siamese_forward.1} parent=0 // pred_fallthru
    _
  // Predicated region
  $region18: #{siamese_forward.1} parent=0 // pred_check
    _
  $region19: #{siamese_forward.1} parent=0 // pred_check_branch
    %19 = sbr.rel (0) target = $region21
  $region20: #{siamese_forward.1} parent=0 // pred_region
    _
  $region21: #{siamese_forward.1} parent=0 // pred_fallthru
    _
  %v21 = vld [vmem:[%s0] sm:$0xff]
  %v22 = vld [vmem:[%s0 + $0x8] sm:$0xff]
  %v23 = vld [vmem:[%s0 + $0x10] sm:$0xff]
  %v24 = vld [vmem:[%s0 + $0x18] sm:$0xff]
  %v25 = vld [vmem:[%s0 + $0x20] sm:$0xff]
  %v26 = vld [vmem:[%s0 + $0x28] sm:$0xff]
  %v27 = vld [vmem:[%s0 + $0x30] sm:$0xff]
  %v28 = vld [vmem:[%s0 + $0x38] sm:$0xff]
  %v29 = vlaneseq
  %v30 = vand.u32 %v29, 127
  %31 = vset.pattern.permute.xlu0 0
  %32 = vperm.xlu0 %31, %v21
  %v33 = vpop.permute.xlu0 %32
  %34 = vset.pattern.permute.xlu0 0
  %35 = vperm.xlu0 %34, %v22
  %v36 = vpop.permute.xlu0 %35
  %37 = vset.pattern.permute.xlu0 0
  %38 = vperm.xlu0 %37, %v23
  %v39 = vpop.permute.xlu0 %38
  %40 = vset.pattern.permute.xlu0 0
  %41 = vperm.xlu0 %40, %v24
  %v42 = vpop.permute.xlu0 %41
  %43 = vset.pattern.permute.xlu0 0
  %44 = vperm.xlu0 %43, %v25
  %v45 = vpop.permute.xlu0 %44
  %46 = vset.pattern.permute.xlu0 0
  %47 = vperm.xlu0 %46, %v26
  %v48 = vpop.permute.xlu0 %47
  %49 = vset.pattern.permute.xlu0 0
  %50 = vperm.xlu0 %49, %v27
  %v51 = vpop.permute.xlu0 %50
  %52 = vset.pattern.permute.xlu0 0
  %53 = vperm.xlu0 %52, %v28
  %v54 = vpop.permute.xlu0 %53
  %vm55 = vcmp.eq.s32.totalorder %v33, %v30
  %vm56 = vcmp.eq.s32.totalorder %v36, %v30
  %vm57 = vcmp.eq.s32.totalorder %v39, %v30
  %vm58 = vcmp.eq.s32.totalorder %v42, %v30
  %vm59 = vcmp.eq.s32.totalorder %v45, %v30
  %vm60 = vcmp.eq.s32.totalorder %v48, %v30
  %vm61 = vcmp.eq.s32.totalorder %v51, %v30
  %vm62 = vcmp.eq.s32.totalorder %v54, %v30
  %v63 = vsel %vm55, 1, 0
  %v64 = vsel %vm56, 1, 0
  %v65 = vsel %vm57, 1, 0
  %v66 = vsel %vm58, 1, 0
  %v67 = vsel %vm59, 1, 0
  %v68 = vsel %vm60, 1, 0
  %v69 = vsel %vm61, 1, 0
  %v70 = vsel %vm62, 1, 0
  %v71 = vcvt.s32.f32 %v63
  %v72 = vcvt.s32.f32 %v64
  %v73 = vcvt.s32.f32 %v65
  %v74 = vcvt.s32.f32 %v66
  %v75 = vcvt.s32.f32 %v67
  %v76 = vcvt.s32.f32 %v68
  %v77 = vcvt.s32.f32 %v69
  %v78 = vcvt.s32.f32 %v70
  %v79 = vpack.c.bf16 %v72, %v71
  %v80 = vpack.c.bf16 %v74, %v73
  %v81 = vpack.c.bf16 %v76, %v75
  %v82 = vpack.c.bf16 %v78, %v77
  %v83 = vld [vmem:[%s2] sm:$0xf]
  %v84 = vld [vmem:[%s2 + $0x4] sm:$0xf]
  %v87 = vunpack.c.l.b16 %v83
  %v88 = vunpack.c.l.b16 %v84
  %v89 = vpack.c.b16 %v88, %v87
  %vm91 = vcmask 130048
  %v93 = vsel %vm91, %v79, 0
  %v96 = vsel %vm91, %v80, 0
  %v99 = vsel %vm91, %v81, 0
  %v102 = vsel %vm91, %v82, 0
  %104 = vmatprep.subr.bf16.mxu0 0
  %105 = vmatpush1.bf16.msra.mxu0 %v89
  %106 = vmatprep.subr.bf16.mxu0 0
  %107 = vmatpush1.bf16.msra.mxu0 0
  %108 = vmatprep.subr.bf16.mxu0 0
  %109 = vmatpush1.bf16.msra.mxu0 0
  %110 = vmatprep.subr.bf16.mxu0 0
  %111 = vmatpush1.bf16.msra.mxu0 0
  %112 = vmatprep.subr.bf16.mxu0 0
  %113 = vmatpush1.bf16.msra.mxu0 0
  %114 = vmatprep.subr.bf16.mxu0 0
  %115 = vmatpush1.bf16.msra.mxu0 0
  %116 = vmatprep.subr.bf16.mxu0 0
  %117 = vmatpush1.bf16.msra.mxu0 0
  %118 = vmatprep.subr.bf16.mxu0 0
  %119 = vmatpush1.bf16.msra.mxu0 0
  %120 = vmatprep.subr.bf16.mxu0 0
  %121 = vmatpush1.bf16.msra.mxu0 0
  %122 = vmatprep.subr.bf16.mxu0 0
  %123 = vmatpush1.bf16.msra.mxu0 0
  %124 = vmatprep.subr.bf16.mxu0 0
  %125 = vmatpush1.bf16.msra.mxu0 0
  %126 = vmatprep.subr.bf16.mxu0 0
  %127 = vmatpush1.bf16.msra.mxu0 0
  %128 = vmatprep.subr.bf16.mxu0 0
  %129 = vmatpush1.bf16.msra.mxu0 0
  %130 = vmatprep.subr.bf16.mxu0 0
  %131 = vmatpush1.bf16.msra.mxu0 0
  %132 = vmatprep.subr.bf16.mxu0 0
  %133 = vmatpush1.bf16.msra.mxu0 0
  %134 = vmatprep.subr.bf16.mxu0 0
  %135 = vmatpush1.bf16.msra.mxu0 0
  %136 = vmatprep.mubr.bf16.mxu0 0
  %137 = vmatmul.mubr.bf16.gmra.mrb[0].mxu0 %v93
  %v138 = vpop.f32.mrb[0].mxu0
  %v139 = vadd.f32 0.0, %v138
  %v140 = vpop.f32.mrb[0].mxu0
  %v141 = vpop.f32.mrb[0].mxu0
  %v142 = vadd.f32 0.0, %v141
  %v143 = vpop.f32.mrb[0].mxu0
  %144 = vmatprep.mubr.bf16.mxu0 0
  %145 = vmatmul.mubr.bf16.gmra.mrb[0].mxu0 %v96
  %v146 = vpop.f32.mrb[0].mxu0
  %v147 = vadd.f32 0.0, %v146
  %v148 = vpop.f32.mrb[0].mxu0
  %v149 = vpop.f32.mrb[0].mxu0
  %v150 = vadd.f32 0.0, %v149
  %v151 = vpop.f32.mrb[0].mxu0
  %152 = vmatprep.mubr.bf16.mxu0 0
  %153 = vmatmul.mubr.bf16.gmra.mrb[0].mxu0 %v99
  %v154 = vpop.f32.mrb[0].mxu0
  %v155 = vadd.f32 0.0, %v154
  %v156 = vpop.f32.mrb[0].mxu0
  %v157 = vpop.f32.mrb[0].mxu0
  %v158 = vadd.f32 0.0, %v157
  %v159 = vpop.f32.mrb[0].mxu0
  %160 = vmatprep.mubr.bf16.mxu0 0
  %161 = vmatmul.mubr.bf16.gmra.mrb[0].mxu0 %v102
  %v162 = vpop.f32.mrb[0].mxu0
  %v163 = vadd.f32 0.0, %v162
  %v164 = vpop.f32.mrb[0].mxu0
  %v165 = vpop.f32.mrb[0].mxu0
  %v166 = vadd.f32 0.0, %v165
  %v167 = vpop.f32.mrb[0].mxu0
  %168 = vdwg.mxu0
  %v169 = vld [vmem:[%s1] sm:$0xff]
  %v170 = vld [vmem:[%s1 + $0x8] sm:$0xff]
  %v171 = vld [vmem:[%s1 + $0x10] sm:$0xff]
  %v172 = vld [vmem:[%s1 + $0x18] sm:$0xff]
  %v173 = vld [vmem:[%s1 + $0x20] sm:$0xff]
  %v174 = vld [vmem:[%s1 + $0x28] sm:$0xff]
  %v175 = vld [vmem:[%s1 + $0x30] sm:$0xff]
  %v176 = vld [vmem:[%s1 + $0x38] sm:$0xff]
  %178 = vset.pattern.permute.xlu0 0
  %179 = vperm.xlu0 %178, %v169
  %v180 = vpop.permute.xlu0 %179
  %183 = vset.pattern.permute.xlu0 0
  %184 = vperm.xlu0 %183, %v170
  %v185 = vpop.permute.xlu0 %184
  %188 = vset.pattern.permute.xlu0 0
  %189 = vperm.xlu0 %188, %v171
  %v190 = vpop.permute.xlu0 %189
  %193 = vset.pattern.permute.xlu0 0
  %194 = vperm.xlu0 %193, %v172
  %v195 = vpop.permute.xlu0 %194
  %198 = vset.pattern.permute.xlu0 0
  %199 = vperm.xlu0 %198, %v173
  %v200 = vpop.permute.xlu0 %199
  %203 = vset.pattern.permute.xlu0 0
  %204 = vperm.xlu0 %203, %v174
  %v205 = vpop.permute.xlu0 %204
  %208 = vset.pattern.permute.xlu0 0
  %209 = vperm.xlu0 %208, %v175
  %v210 = vpop.permute.xlu0 %209
  %213 = vset.pattern.permute.xlu0 0
  %214 = vperm.xlu0 %213, %v176
  %v215 = vpop.permute.xlu0 %214
  %v217 = vmul.f32 %v139, %v180
  %v218 = vmul.f32 %v142, %v185
  %v219 = vmul.f32 %v147, %v190
  %v220 = vmul.f32 %v150, %v195
  %v221 = vmul.f32 %v155, %v200
  %v222 = vmul.f32 %v158, %v205
  %v223 = vmul.f32 %v163, %v210
  %v224 = vmul.f32 %v166, %v215
  %v225 = vld [vmem:[%s4] sm:$0x1]
  %v227 = vlaneseq
  %v228 = vshrl.u32 %v227, 7
  %v229 = vsub.s32 0, %v228
  %v230 = vrot.slane %v225, %v229
  %v232 = vadd.f32 %v217, %v230
  %v233 = vadd.f32 %v218, %v230
  %v234 = vadd.f32 %v219, %v230
  %v235 = vadd.f32 %v220, %v230
  %v236 = vadd.f32 %v221, %v230
  %v237 = vadd.f32 %v222, %v230
  %v238 = vadd.f32 %v223, %v230
  %v239 = vadd.f32 %v224, %v230
  %v240 = vld [vmem:[%s3] sm:$0xf]
  %v241 = vld [vmem:[%s3 + $0x4] sm:$0xf]
  %v242 = vld [vmem:[%s3 + $0x8] sm:$0xf]
  %v243 = vld [vmem:[%s3 + $0xc] sm:$0xf]
  %v248 = vunpack.c.l.b16 %v240
  %v249 = vunpack.c.l.b16 %v241
  %v250 = vunpack.c.l.b16 %v242
  %v251 = vunpack.c.l.b16 %v243
  %v252 = vpack.c.b16 %v249, %v248
  %v253 = vpack.c.b16 %v251, %v250
  %vm256 = vcmask 261120
  %v258 = vsel %vm256, 0, 0
  %260 = vmatprep.subr.bf16.mxu0 0
  %261 = vmatpush1.bf16.msra.mxu0 %v252
  %262 = vmatprep.subr.bf16.mxu0 0
  %263 = vmatpush1.bf16.msra.mxu0 %v253
  %264 = vmatprep.subr.bf16.mxu0 0
  %265 = vmatpush1.bf16.msra.mxu0 0
  %266 = vmatprep.subr.bf16.mxu0 0
  %267 = vmatpush1.bf16.msra.mxu0 0
  %268 = vmatprep.subr.bf16.mxu0 0
  %269 = vmatpush1.bf16.msra.mxu0 0
  %270 = vmatprep.subr.bf16.mxu0 0
  %271 = vmatpush1.bf16.msra.mxu0 0
  %272 = vmatprep.subr.bf16.mxu0 0
  %273 = vmatpush1.bf16.msra.mxu0 0
  %274 = vmatprep.subr.bf16.mxu0 0
  %275 = vmatpush1.bf16.msra.mxu0 0
  %276 = vmatprep.subr.bf16.mxu0 0
  %277 = vmatpush1.bf16.msra.mxu0 0
  %278 = vmatprep.subr.bf16.mxu0 0
  %279 = vmatpush1.bf16.msra.mxu0 0
  %280 = vmatprep.subr.bf16.mxu0 0
  %281 = vmatpush1.bf16.msra.mxu0 0
  %282 = vmatprep.subr.bf16.mxu0 0
  %283 = vmatpush1.bf16.msra.mxu0 0
  %284 = vmatprep.subr.bf16.mxu0 0
  %285 = vmatpush1.bf16.msra.mxu0 0
  %286 = vmatprep.subr.bf16.mxu0 0
  %287 = vmatpush1.bf16.msra.mxu0 0
  %288 = vmatprep.subr.bf16.mxu0 0
  %289 = vmatpush1.bf16.msra.mxu0 0
  %290 = vmatprep.subr.bf16.mxu0 0
  %291 = vmatpush1.bf16.msra.mxu0 0
  %292 = vmatprep.mubr.bf16.mxu0 0
  %293 = vmatmul.mubr.bf16.gmra.mrb[0].mxu0 %v258
  %v294 = vpop.f32.mrb[0].mxu0
  %v295 = vadd.f32 %v232, %v294
  %v296 = vpop.f32.mrb[0].mxu0
  %v297 = vpop.f32.mrb[0].mxu0
  %v298 = vpop.f32.mrb[0].mxu0
  %299 = vdwg.mxu0
  %v300 = vxor.u32 %v295, 2147483648
  %v301 = vmul.f32 %v300, 1.442695
  %v302 = vpow.pop %v301
  %v303 = vadd.f32 %v302, 1.0
  %v304 = vrcp.pop %v303
  %v305 = vmul.f32 1.0, %v304
  %v306 = vtanh.pop %v295
  %v307 = vmul.f32 %v305, 0.0
  %309 = vrot.lane.b32.xlu0 %v306, 32
  %v310 = vpop.permute.xlu0 %309
  %v312 = vmul.f32 %v305, %v310
  %314 = vrot.lane.b32.xlu0 %v312, 32
  %v315 = vpop.permute.xlu0 %314
  %v317 = vadd.f32 %v307, %v315
  %v318 = vtanh.pop %v317
  %320 = vrot.lane.b32.xlu0 %v318, 32
  %v321 = vpop.permute.xlu0 %320
  %v323 = vmul.f32 %v305, %v321
  %v324 = vpack.c.bf16 %v323, %v323
  %326 = vrot.lane.b32.xlu0 %v324, 64
  %v327 = vpop.permute.xlu0 %326
  %v329 = vsel %vm256, %v327, 0
  %331 = vmatprep.subr.bf16.mxu0 0
  %332 = vmatpush1.bf16.msra.mxu0 %v252
  %333 = vmatprep.subr.bf16.mxu0 0
  %334 = vmatpush1.bf16.msra.mxu0 %v253
  %335 = vmatprep.subr.bf16.mxu0 0
  %336 = vmatpush1.bf16.msra.mxu0 0
  %337 = vmatprep.subr.bf16.mxu0 0
  %338 = vmatpush1.bf16.msra.mxu0 0
  %339 = vmatprep.subr.bf16.mxu0 0
  %340 = vmatpush1.bf16.msra.mxu0 0
  %341 = vmatprep.subr.bf16.mxu0 0
  %342 = vmatpush1.bf16.msra.mxu0 0
  %343 = vmatprep.subr.bf16.mxu0 0
  %344 = vmatpush1.bf16.msra.mxu0 0
  %345 = vmatprep.subr.bf16.mxu0 0
  %346 = vmatpush1.bf16.msra.mxu0 0
  %347 = vmatprep.subr.bf16.mxu0 0
  %348 = vmatpush1.bf16.msra.mxu0 0
  %349 = vmatprep.subr.bf16.mxu0 0
  %350 = vmatpush1.bf16.msra.mxu0 0
  %351 = vmatprep.subr.bf16.mxu0 0
  %352 = vmatpush1.bf16.msra.mxu0 0
  %353 = vmatprep.subr.bf16.mxu0 0
  %354 = vmatpush1.bf16.msra.mxu0 0
  %355 = vmatprep.subr.bf16.mxu0 0
  %356 = vmatpush1.bf16.msra.mxu0 0
  %357 = vmatprep.subr.bf16.mxu0 0
  %358 = vmatpush1.bf16.msra.mxu0 0
  %359 = vmatprep.subr.bf16.mxu0 0
  %360 = vmatpush1.bf16.msra.mxu0 0
  %361 = vmatprep.subr.bf16.mxu0 0
  %362 = vmatpush1.bf16.msra.mxu0 0
  %363 = vmatprep.mubr.bf16.mxu0 0
  %364 = vmatmul.mubr.bf16.gmra.mrb[0].mxu0 %v329
  %v365 = vpop.f32.mrb[0].mxu0
  %v366 = vadd.f32 %v233, %v365
  %v367 = vpop.f32.mrb[0].mxu0
  %v368 = vpop.f32.mrb[0].mxu0
  %v369 = vpop.f32.mrb[0].mxu0
  %370 = vdwg.mxu0
  %v371 = vxor.u32 %v366, 2147483648
  %v372 = vmul.f32 %v371, 1.442695
  %v373 = vpow.pop %v372
  %v374 = vadd.f32 %v373, 1.0
  %v375 = vrcp.pop %v374
  %v376 = vmul.f32 1.0, %v375
  %v377 = vtanh.pop %v366
  %v378 = vmul.f32 %v376, %v317
  %380 = vrot.lane.b32.xlu0 %v377, 32
  %v381 = vpop.permute.xlu0 %380
  %v383 = vmul.f32 %v376, %v381
  %385 = vrot.lane.b32.xlu0 %v383, 32
  %v386 = vpop.permute.xlu0 %385
  %v388 = vadd.f32 %v378, %v386
  %v389 = vtanh.pop %v388
  %391 = vrot.lane.b32.xlu0 %v389, 32
  %v392 = vpop.permute.xlu0 %391
  %v394 = vmul.f32 %v376, %v392
  %v395 = vpack.c.bf16 %v394, %v394
  %397 = vrot.lane.b32.xlu0 %v395, 64
  %v398 = vpop.permute.xlu0 %397
  %v400 = vsel %vm256, %v398, 0
  %402 = vmatprep.subr.bf16.mxu0 0
  %403 = vmatpush1.bf16.msra.mxu0 %v252
  %404 = vmatprep.subr.bf16.mxu0 0
  %405 = vmatpush1.bf16.msra.mxu0 %v253
  %406 = vmatprep.subr.bf16.mxu0 0
  %407 = vmatpush1.bf16.msra.mxu0 0
  %408 = vmatprep.subr.bf16.mxu0 0
  %409 = vmatpush1.bf16.msra.mxu0 0
  %410 = vmatprep.subr.bf16.mxu0 0
  %411 = vmatpush1.bf16.msra.mxu0 0
  %412 = vmatprep.subr.bf16.mxu0 0
  %413 = vmatpush1.bf16.msra.mxu0 0
  %414 = vmatprep.subr.bf16.mxu0 0
  %415 = vmatpush1.bf16.msra.mxu0 0
  %416 = vmatprep.subr.bf16.mxu0 0
  %417 = vmatpush1.bf16.msra.mxu0 0
  %418 = vmatprep.subr.bf16.mxu0 0
  %419 = vmatpush1.bf16.msra.mxu0 0
  %420 = vmatprep.subr.bf16.mxu0 0
  %421 = vmatpush1.bf16.msra.mxu0 0
  %422 = vmatprep.subr.bf16.mxu0 0
  %423 = vmatpush1.bf16.msra.mxu0 0
  %424 = vmatprep.subr.bf16.mxu0 0
  %425 = vmatpush1.bf16.msra.mxu0 0
  %426 = vmatprep.subr.bf16.mxu0 0
  %427 = vmatpush1.bf16.msra.mxu0 0
  %428 = vmatprep.subr.bf16.mxu0 0
  %429 = vmatpush1.bf16.msra.mxu0 0
  %430 = vmatprep.subr.bf16.mxu0 0
  %431 = vmatpush1.bf16.msra.mxu0 0
  %432 = vmatprep.subr.bf16.mxu0 0
  %433 = vmatpush1.bf16.msra.mxu0 0
  %434 = vmatprep.mubr.bf16.mxu0 0
  %435 = vmatmul.mubr.bf16.gmra.mrb[0].mxu0 %v400
  %v436 = vpop.f32.mrb[0].mxu0
  %v437 = vadd.f32 %v234, %v436
  %v438 = vpop.f32.mrb[0].mxu0
  %v439 = vpop.f32.mrb[0].mxu0
  %v440 = vpop.f32.mrb[0].mxu0
  %441 = vdwg.mxu0
  %v442 = vxor.u32 %v437, 2147483648
  %v443 = vmul.f32 %v442, 1.442695
  %v444 = vpow.pop %v443
  %v445 = vadd.f32 %v444, 1.0
  %v446 = vrcp.pop %v445
  %v447 = vmul.f32 1.0, %v446
  %v448 = vtanh.pop %v437
  %v449 = vmul.f32 %v447, %v388
  %451 = vrot.lane.b32.xlu0 %v448, 32
  %v452 = vpop.permute.xlu0 %451
  %v454 = vmul.f32 %v447, %v452
  %456 = vrot.lane.b32.xlu0 %v454, 32
  %v457 = vpop.permute.xlu0 %456
  %v459 = vadd.f32 %v449, %v457
  %v460 = vtanh.pop %v459
  %462 = vrot.lane.b32.xlu0 %v460, 32
  %v463 = vpop.permute.xlu0 %462
  %v465 = vmul.f32 %v447, %v463
  %v466 = vpack.c.bf16 %v465, %v465
  %468 = vrot.lane.b32.xlu0 %v466, 64
  %v469 = vpop.permute.xlu0 %468
  %v471 = vsel %vm256, %v469, 0
  %473 = vmatprep.subr.bf16.mxu0 0
  %474 = vmatpush1.bf16.msra.mxu0 %v252
  %475 = vmatprep.subr.bf16.mxu0 0
  %476 = vmatpush1.bf16.msra.mxu0 %v253
  %477 = vmatprep.subr.bf16.mxu0 0
  %478 = vmatpush1.bf16.msra.mxu0 0
  %479 = vmatprep.subr.bf16.mxu0 0
  %480 = vmatpush1.bf16.msra.mxu0 0
  %481 = vmatprep.subr.bf16.mxu0 0
  %482 = vmatpush1.bf16.msra.mxu0 0
  %483 = vmatprep.subr.bf16.mxu0 0
  %484 = vmatpush1.bf16.msra.mxu0 0
  %485 = vmatprep.subr.bf16.mxu0 0
  %486 = vmatpush1.bf16.msra.mxu0 0
  %487 = vmatprep.subr.bf16.mxu0 0
  %488 = vmatpush1.bf16.msra.mxu0 0
  %489 = vmatprep.subr.bf16.mxu0 0
  %490 = vmatpush1.bf16.msra.mxu0 0
  %491 = vmatprep.subr.bf16.mxu0 0
  %492 = vmatpush1.bf16.msra.mxu0 0
  %493 = vmatprep.subr.bf16.mxu0 0
  %494 = vmatpush1.bf16.msra.mxu0 0
  %495 = vmatprep.subr.bf16.mxu0 0
  %496 = vmatpush1.bf16.msra.mxu0 0
  %497 = vmatprep.subr.bf16.mxu0 0
  %498 = vmatpush1.bf16.msra.mxu0 0
  %499 = vmatprep.subr.bf16.mxu0 0
  %500 = vmatpush1.bf16.msra.mxu0 0
  %501 = vmatprep.subr.bf16.mxu0 0
  %502 = vmatpush1.bf16.msra.mxu0 0
  %503 = vmatprep.subr.bf16.mxu0 0
  %504 = vmatpush1.bf16.msra.mxu0 0
  %505 = vmatprep.mubr.bf16.mxu0 0
  %506 = vmatmul.mubr.bf16.gmra.mrb[0].mxu0 %v471
  %v507 = vpop.f32.mrb[0].mxu0
  %v508 = vadd.f32 %v235, %v507
  %v509 = vpop.f32.mrb[0].mxu0
  %v510 = vpop.f32.mrb[0].mxu0
  %v511 = vpop.f32.mrb[0].mxu0
  %512 = vdwg.mxu0
  %v513 = vxor.u32 %v508, 2147483648
  %v514 = vmul.f32 %v513, 1.442695
  %v515 = vpow.pop %v514
  %v516 = vadd.f32 %v515, 1.0
  %v517 = vrcp.pop %v516
  %v518 = vmul.f32 1.0, %v517
  %v519 = vtanh.pop %v508
  %v520 = vmul.f32 %v518, %v459
  %522 = vrot.lane.b32.xlu0 %v519, 32
  %v523 = vpop.permute.xlu0 %522
  %v525 = vmul.f32 %v518, %v523
  %527 = vrot.lane.b32.xlu0 %v525, 32
  %v528 = vpop.permute.xlu0 %527
  %v530 = vadd.f32 %v520, %v528
  %v531 = vtanh.pop %v530
  %533 = vrot.lane.b32.xlu0 %v531, 32
  %v534 = vpop.permute.xlu0 %533
  %v536 = vmul.f32 %v518, %v534
  %v537 = vpack.c.bf16 %v536, %v536
  %539 = vrot.lane.b32.xlu0 %v537, 64
  %v540 = vpop.permute.xlu0 %539
  %v542 = vsel %vm256, %v540, 0
  %544 = vmatprep.subr.bf16.mxu0 0
  %545 = vmatpush1.bf16.msra.mxu0 %v252
  %546 = vmatprep.subr.bf16.mxu0 0
  %547 = vmatpush1.bf16.msra.mxu0 %v253
  %548 = vmatprep.subr.bf16.mxu0 0
  %549 = vmatpush1.bf16.msra.mxu0 0
  %550 = vmatprep.subr.bf16.mxu0 0
  %551 = vmatpush1.bf16.msra.mxu0 0
  %552 = vmatprep.subr.bf16.mxu0 0
  %553 = vmatpush1.bf16.msra.mxu0 0
  %554 = vmatprep.subr.bf16.mxu0 0
  %555 = vmatpush1.bf16.msra.mxu0 0
  %556 = vmatprep.subr.bf16.mxu0 0
  %557 = vmatpush1.bf16.msra.mxu0 0
  %558 = vmatprep.subr.bf16.mxu0 0
  %559 = vmatpush1.bf16.msra.mxu0 0
  %560 = vmatprep.subr.bf16.mxu0 0
  %561 = vmatpush1.bf16.msra.mxu0 0
  %562 = vmatprep.subr.bf16.mxu0 0
  %563 = vmatpush1.bf16.msra.mxu0 0
  %564 = vmatprep.subr.bf16.mxu0 0
  %565 = vmatpush1.bf16.msra.mxu0 0
  %566 = vmatprep.subr.bf16.mxu0 0
  %567 = vmatpush1.bf16.msra.mxu0 0
  %568 = vmatprep.subr.bf16.mxu0 0
  %569 = vmatpush1.bf16.msra.mxu0 0
  %570 = vmatprep.subr.bf16.mxu0 0
  %571 = vmatpush1.bf16.msra.mxu0 0
  %572 = vmatprep.subr.bf16.mxu0 0
  %573 = vmatpush1.bf16.msra.mxu0 0
  %574 = vmatprep.subr.bf16.mxu0 0
  %575 = vmatpush1.bf16.msra.mxu0 0
  %576 = vmatprep.mubr.bf16.mxu0 0
  %577 = vmatmul.mubr.bf16.gmra.mrb[0].mxu0 %v542
  %v578 = vpop.f32.mrb[0].mxu0
  %v579 = vadd.f32 %v236, %v578
  %v580 = vpop.f32.mrb[0].mxu0
  %v581 = vpop.f32.mrb[0].mxu0
  %v582 = vpop.f32.mrb[0].mxu0
  %583 = vdwg.mxu0
  %v584 = vxor.u32 %v579, 2147483648
  %v585 = vmul.f32 %v584, 1.442695
  %v586 = vpow.pop %v585
  %v587 = vadd.f32 %v586, 1.0
  %v588 = vrcp.pop %v587
  %v589 = vmul.f32 1.0, %v588
  %v590 = vtanh.pop %v579
  %v591 = vmul.f32 %v589, %v530
  %593 = vrot.lane.b32.xlu0 %v590, 32
  %v594 = vpop.permute.xlu0 %593
  %v596 = vmul.f32 %v589, %v594
  %598 = vrot.lane.b32.xlu0 %v596, 32
  %v599 = vpop.permute.xlu0 %598
  %v601 = vadd.f32 %v591, %v599
  %v602 = vtanh.pop %v601
  %604 = vrot.lane.b32.xlu0 %v602, 32
  %v605 = vpop.permute.xlu0 %604
  %v607 = vmul.f32 %v589, %v605
  %v608 = vpack.c.bf16 %v607, %v607
  %610 = vrot.lane.b32.xlu0 %v608, 64
  %v611 = vpop.permute.xlu0 %610
  %v613 = vsel %vm256, %v611, 0
  %615 = vmatprep.subr.bf16.mxu0 0
  %616 = vmatpush1.bf16.msra.mxu0 %v252
  %617 = vmatprep.subr.bf16.mxu0 0
  %618 = vmatpush1.bf16.msra.mxu0 %v253
  %619 = vmatprep.subr.bf16.mxu0 0
  %620 = vmatpush1.bf16.msra.mxu0 0
  %621 = vmatprep.subr.bf16.mxu0 0
  %622 = vmatpush1.bf16.msra.mxu0 0
  %623 = vmatprep.subr.bf16.mxu0 0
  %624 = vmatpush1.bf16.msra.mxu0 0
  %625 = vmatprep.subr.bf16.mxu0 0
  %626 = vmatpush1.bf16.msra.mxu0 0
  %627 = vmatprep.subr.bf16.mxu0 0
  %628 = vmatpush1.bf16.msra.mxu0 0
  %629 = vmatprep.subr.bf16.mxu0 0
  %630 = vmatpush1.bf16.msra.mxu0 0
  %631 = vmatprep.subr.bf16.mxu0 0
  %632 = vmatpush1.bf16.msra.mxu0 0
  %633 = vmatprep.subr.bf16.mxu0 0
  %634 = vmatpush1.bf16.msra.mxu0 0
  %635 = vmatprep.subr.bf16.mxu0 0
  %636 = vmatpush1.bf16.msra.mxu0 0
  %637 = vmatprep.subr.bf16.mxu0 0
  %638 = vmatpush1.bf16.msra.mxu0 0
  %639 = vmatprep.subr.bf16.mxu0 0
  %640 = vmatpush1.bf16.msra.mxu0 0
  %641 = vmatprep.subr.bf16.mxu0 0
  %642 = vmatpush1.bf16.msra.mxu0 0
  %643 = vmatprep.subr.bf16.mxu0 0
  %644 = vmatpush1.bf16.msra.mxu0 0
  %645 = vmatprep.subr.bf16.mxu0 0
  %646 = vmatpush1.bf16.msra.mxu0 0
  %647 = vmatprep.mubr.bf16.mxu0 0
  %648 = vmatmul.mubr.bf16.gmra.mrb[0].mxu0 %v613
  %v649 = vpop.f32.mrb[0].mxu0
  %v650 = vadd.f32 %v237, %v649
  %v651 = vpop.f32.mrb[0].mxu0
  %v652 = vpop.f32.mrb[0].mxu0
  %v653 = vpop.f32.mrb[0].mxu0
  %654 = vdwg.mxu0
  %v655 = vxor.u32 %v650, 2147483648
  %v656 = vmul.f32 %v655, 1.442695
  %v657 = vpow.pop %v656
  %v658 = vadd.f32 %v657, 1.0
  %v659 = vrcp.pop %v658
  %v660 = vmul.f32 1.0, %v659
  %v661 = vtanh.pop %v650
  %v662 = vmul.f32 %v660, %v601
  %664 = vrot.lane.b32.xlu0 %v661, 32
  %v665 = vpop.permute.xlu0 %664
  %v667 = vmul.f32 %v660, %v665
  %669 = vrot.lane.b32.xlu0 %v667, 32
  %v670 = vpop.permute.xlu0 %669
  %v672 = vadd.f32 %v662, %v670
  %v673 = vtanh.pop %v672
  %675 = vrot.lane.b32.xlu0 %v673, 32
  %v676 = vpop.permute.xlu0 %675
  %v678 = vmul.f32 %v660, %v676
  %v679 = vpack.c.bf16 %v678, %v678
  %681 = vrot.lane.b32.xlu0 %v679, 64
  %v682 = vpop.permute.xlu0 %681
  %v684 = vsel %vm256, %v682, 0
  %686 = vmatprep.subr.bf16.mxu0 0
  %687 = vmatpush1.bf16.msra.mxu0 %v252
  %688 = vmatprep.subr.bf16.mxu0 0
  %689 = vmatpush1.bf16.msra.mxu0 %v253
  %690 = vmatprep.subr.bf16.mxu0 0
  %691 = vmatpush1.bf16.msra.mxu0 0
  %692 = vmatprep.subr.bf16.mxu0 0
  %693 = vmatpush1.bf16.msra.mxu0 0
  %694 = vmatprep.subr.bf16.mxu0 0
  %695 = vmatpush1.bf16.msra.mxu0 0
  %696 = vmatprep.subr.bf16.mxu0 0
  %697 = vmatpush1.bf16.msra.mxu0 0
  %698 = vmatprep.subr.bf16.mxu0 0
  %699 = vmatpush1.bf16.msra.mxu0 0
  %700 = vmatprep.subr.bf16.mxu0 0
  %701 = vmatpush1.bf16.msra.mxu0 0
  %702 = vmatprep.subr.bf16.mxu0 0
  %703 = vmatpush1.bf16.msra.mxu0 0
  %704 = vmatprep.subr.bf16.mxu0 0
  %705 = vmatpush1.bf16.msra.mxu0 0
  %706 = vmatprep.subr.bf16.mxu0 0
  %707 = vmatpush1.bf16.msra.mxu0 0
  %708 = vmatprep.subr.bf16.mxu0 0
  %709 = vmatpush1.bf16.msra.mxu0 0
  %710 = vmatprep.subr.bf16.mxu0 0
  %711 = vmatpush1.bf16.msra.mxu0 0
  %712 = vmatprep.subr.bf16.mxu0 0
  %713 = vmatpush1.bf16.msra.mxu0 0
  %714 = vmatprep.subr.bf16.mxu0 0
  %715 = vmatpush1.bf16.msra.mxu0 0
  %716 = vmatprep.subr.bf16.mxu0 0
  %717 = vmatpush1.bf16.msra.mxu0 0
  %718 = vmatprep.mubr.bf16.mxu0 0
  %719 = vmatmul.mubr.bf16.gmra.mrb[0].mxu0 %v684
  %v720 = vpop.f32.mrb[0].mxu0
  %v721 = vadd.f32 %v238, %v720
  %v722 = vpop.f32.mrb[0].mxu0
  %v723 = vpop.f32.mrb[0].mxu0
  %v724 = vpop.f32.mrb[0].mxu0
  %725 = vdwg.mxu0
  %v726 = vxor.u32 %v721, 2147483648
  %v727 = vmul.f32 %v726, 1.442695
  %v728 = vpow.pop %v727
  %v729 = vadd.f32 %v728, 1.0
  %v730 = vrcp.pop %v729
  %v731 = vmul.f32 1.0, %v730
  %v732 = vtanh.pop %v721
  %v733 = vmul.f32 %v731, %v672
  %735 = vrot.lane.b32.xlu0 %v732, 32
  %v736 = vpop.permute.xlu0 %735
  %v738 = vmul.f32 %v731, %v736
  %740 = vrot.lane.b32.xlu0 %v738, 32
  %v741 = vpop.permute.xlu0 %740
  %v743 = vadd.f32 %v733, %v741
  %v744 = vtanh.pop %v743
  %746 = vrot.lane.b32.xlu0 %v744, 32
  %v747 = vpop.permute.xlu0 %746
  %v749 = vmul.f32 %v731, %v747
  %v750 = vpack.c.bf16 %v749, %v749
  %752 = vrot.lane.b32.xlu0 %v750, 64
  %v753 = vpop.permute.xlu0 %752
  %v755 = vsel %vm256, %v753, 0
  %757 = vmatprep.subr.bf16.mxu0 0
  %758 = vmatpush1.bf16.msra.mxu0 %v252
  %759 = vmatprep.subr.bf16.mxu0 0
  %760 = vmatpush1.bf16.msra.mxu0 %v253
  %761 = vmatprep.subr.bf16.mxu0 0
  %762 = vmatpush1.bf16.msra.mxu0 0
  %763 = vmatprep.subr.bf16.mxu0 0
  %764 = vmatpush1.bf16.msra.mxu0 0
  %765 = vmatprep.subr.bf16.mxu0 0
  %766 = vmatpush1.bf16.msra.mxu0 0
  %767 = vmatprep.subr.bf16.mxu0 0
  %768 = vmatpush1.bf16.msra.mxu0 0
  %769 = vmatprep.subr.bf16.mxu0 0
  %770 = vmatpush1.bf16.msra.mxu0 0
  %771 = vmatprep.subr.bf16.mxu0 0
  %772 = vmatpush1.bf16.msra.mxu0 0
  %773 = vmatprep.subr.bf16.mxu0 0
  %774 = vmatpush1.bf16.msra.mxu0 0
  %775 = vmatprep.subr.bf16.mxu0 0
  %776 = vmatpush1.bf16.msra.mxu0 0
  %777 = vmatprep.subr.bf16.mxu0 0
  %778 = vmatpush1.bf16.msra.mxu0 0
  %779 = vmatprep.subr.bf16.mxu0 0
  %780 = vmatpush1.bf16.msra.mxu0 0
  %781 = vmatprep.subr.bf16.mxu0 0
  %782 = vmatpush1.bf16.msra.mxu0 0
  %783 = vmatprep.subr.bf16.mxu0 0
  %784 = vmatpush1.bf16.msra.mxu0 0
  %785 = vmatprep.subr.bf16.mxu0 0
  %786 = vmatpush1.bf16.msra.mxu0 0
  %787 = vmatprep.subr.bf16.mxu0 0
  %788 = vmatpush1.bf16.msra.mxu0 0
  %789 = vmatprep.mubr.bf16.mxu0 0
  %790 = vmatmul.mubr.bf16.gmra.mrb[0].mxu0 %v755
  %v791 = vpop.f32.mrb[0].mxu0
  %v792 = vadd.f32 %v239, %v791
  %v793 = vpop.f32.mrb[0].mxu0
  %v794 = vpop.f32.mrb[0].mxu0
  %v795 = vpop.f32.mrb[0].mxu0
  %796 = vdwg.mxu0
  %v797 = vxor.u32 %v792, 2147483648
  %v798 = vmul.f32 %v797, 1.442695
  %v799 = vpow.pop %v798
  %v800 = vadd.f32 %v799, 1.0
  %v801 = vrcp.pop %v800
  %v802 = vmul.f32 1.0, %v801
  %v803 = vtanh.pop %v792
  %v804 = vmul.f32 %v802, %v743
  %806 = vrot.lane.b32.xlu0 %v803, 32
  %v807 = vpop.permute.xlu0 %806
  %v809 = vmul.f32 %v802, %v807
  %811 = vrot.lane.b32.xlu0 %v809, 32
  %v812 = vpop.permute.xlu0 %811
  %v814 = vadd.f32 %v804, %v812
  %v815 = vtanh.pop %v814
  %817 = vrot.lane.b32.xlu0 %v815, 32
  %v818 = vpop.permute.xlu0 %817
  %v820 = vmul.f32 %v802, %v818
  %822 = vrot.lane.b32.xlu0 %v820, 64
  %v823 = vpop.permute.xlu0 %822
  %825 = vst.msk [vmem:[%s5] sm:$0xff] %vm256, %v823
  // Predicated region
  $region22: #{siamese_forward.1} parent=0 // pred_check
    _
  $region23: #{siamese_forward.1} parent=0 // pred_check_branch
    %827 = sbr.rel (0) target = $region25
  $region24: #{siamese_forward.1} parent=0 // pred_region
    _
  $region25: #{siamese_forward.1} parent=0 // pred_fallthru
    _
  // Predicated region
  $region26: #{siamese_forward.1} parent=0 // pred_check
    _
  $region27: #{siamese_forward.1} parent=0 // pred_check_branch
    %829 = sbr.rel (0) target = $region29
  $region28: #{siamese_forward.1} parent=0 // pred_region
    _
  $region29: #{siamese_forward.1} parent=0 // pred_fallthru
    _

</llo_original>
